<compile_context>
chip_gen: v5e
topology: v5e:2x2
jax: 0.10.0
libtpu: 0.0.40
codegen_flags: <defaults>
</compile_context>

<pallas_src>
import jax
import jax.numpy as jnp
from jax.experimental import pallas as pl
from jax.experimental.pallas import tpu as pltpu

LANE = 128      # hidden lane padding (full vreg width)
OUT_PAD = 8     # output lane padding (7 classes -> 8 f32 lanes = 32 B/row)
HIDDEN = (64, 32, 16)


def _round_up(a, m):
    return (a + m - 1) // m * m


def mlp_kernel(x_ref, w1_ref, b1_ref, w2_ref, b2_ref,
               w3_ref, b3_ref, w4_ref, b4_ref, o_ref):
    """One batch tile: (Linear -> ReLU) x3 -> Linear, fully fused in VMEM.

    x arrives as f32 and is cast to bf16 on the VPU (no wrapper HBM pass);
    every dot hits the MXU with f32 accumulation; bias add / ReLU stay f32;
    the final store is only OUT_PAD (=8) f32 lanes wide.
    """
    h = x_ref[...].astype(jnp.bfloat16)                              # [tb, in_dim]
    h = jnp.dot(h, w1_ref[...], preferred_element_type=jnp.float32) + b1_ref[...]
    h = jnp.maximum(h, 0.0).astype(jnp.bfloat16)                     # [tb, 128]
    h = jnp.dot(h, w2_ref[...], preferred_element_type=jnp.float32) + b2_ref[...]
    h = jnp.maximum(h, 0.0).astype(jnp.bfloat16)                     # [tb, 128]
    h = jnp.dot(h, w3_ref[...], preferred_element_type=jnp.float32) + b3_ref[...]
    h = jnp.maximum(h, 0.0).astype(jnp.bfloat16)                     # [tb, 128]
    h = jnp.dot(h, w4_ref[...], preferred_element_type=jnp.float32) + b4_ref[...]
    o_ref[...] = h.astype(o_ref.dtype)                               # [tb, 8]


def pack_params(params):
    """Zero-pad lane dims (128 for hidden layers, 8 for the output layer) and
    cast weights to bf16; biases stay f32.  Zero padding keeps padded lanes at
    exactly 0 through ReLU, so padded output columns are exactly 0.0."""
    packed = {}
    for i in range(1, 5):
        w = params[f"w{i}"]
        b = params[f"b{i}"]
        fan_in, fan_out = w.shape
        pad_in = fan_in if i == 1 else LANE      # layer 1 keeps the raw 54-feature axis
        pad_out = OUT_PAD if i == 4 else LANE
        wp = jnp.zeros((pad_in, pad_out), jnp.float32).at[:fan_in, :fan_out].set(w)
        bp = jnp.zeros((1, pad_out), jnp.float32).at[:, :fan_out].set(b)
        packed[f"w{i}"] = wp.astype(jnp.bfloat16)
        packed[f"b{i}"] = bp
    return packed


def mlp_forward(x, params, *, tile_batch=2048):
    """x: [B, input_dim] float32 (passed to the kernel unconverted).
    params: unpadded f32 weights/biases. Returns [B, output_dim] f32 logits."""
    B, in_dim = x.shape
    out_dim = params["w4"].shape[1]
    packed = pack_params(params)

    # Batch tile: 16-aligned (bf16 sublane packing).  When the whole batch
    # would fit one tile, split into two so v7x's two TensorCores both get
    # work via the "parallel" grid axis (no-op on v5e/v6e).
    padded_b = _round_up(B, 16)
    tb = min(tile_batch, padded_b)
    if padded_b > 16 and tb >= padded_b:
        tb = padded_b // 2
    tb = _round_up(tb, 16)
    padded_b = _round_up(B, tb)
    n_tiles = padded_b // tb

    xp = x if padded_b == B else jnp.pad(x, ((0, padded_b - B), (0, 0)))

    args = (xp,
            packed["w1"], packed["b1"], packed["w2"], packed["b2"],
            packed["w3"], packed["b3"], packed["w4"], packed["b4"])

    in_specs = [pl.BlockSpec((tb, in_dim), lambda i: (i, 0))]
    for a in args[1:]:
        # Constant block index -> weights/biases stay VMEM-resident across the grid.
        in_specs.append(pl.BlockSpec(a.shape, lambda i: (0, 0)))

    flops = 2 * padded_b * (in_dim * LANE + LANE * LANE + LANE * LANE + LANE * OUT_PAD)
    bytes_accessed = int(xp.size) * 4 + padded_b * OUT_PAD * 4 \
        + sum(int(a.size) * a.dtype.itemsize for a in args[1:])

    out_padded = pl.pallas_call(
        mlp_kernel,
        out_shape=jax.ShapeDtypeStruct((padded_b, OUT_PAD), jnp.float32),
        grid=(n_tiles,),
        in_specs=in_specs,
        out_specs=pl.BlockSpec((tb, OUT_PAD), lambda i: (i, 0)),
        compiler_params=pltpu.CompilerParams(
            dimension_semantics=("parallel",)),
        cost_estimate=pl.CostEstimate(
            flops=flops, transcendentals=0, bytes_accessed=bytes_accessed),
    )(*args)

    # Columns >= out_dim of the padded output are exactly 0.0 and padded batch
    # rows carry zero-input (bias-only) logits; both are sliced off here.
    return out_padded[:B, :out_dim]


def init_params(key, input_dim, output_dim):
    """Deterministic init mirroring nn.Linear default (uniform +-1/sqrt(fan_in))."""
    dims = [(input_dim, 64), (64, 32), (32, 16), (16, output_dim)]
    params = {}
    for i, (fan_in, fan_out) in enumerate(dims, start=1):
        key, kw, kb = jax.random.split(key, 3)
        bound = 1.0 / jnp.sqrt(fan_in)
        params[f"w{i}"] = jax.random.uniform(
            kw, (fan_in, fan_out), jnp.float32, -bound, bound)
        params[f"b{i}"] = jax.random.uniform(
            kb, (1, fan_out), jnp.float32, -bound, bound)
    return params


def reference_forward_bf16(x, params):
    """Matches the kernel's numerics: bf16 dot operands, f32 accumulate/elementwise."""
    h = x.astype(jnp.bfloat16)
    for i in (1, 2, 3):
        w = params[f"w{i}"].astype(jnp.bfloat16)
        h = jnp.maximum(
            jnp.dot(h, w, preferred_element_type=jnp.float32) + params[f"b{i}"], 0.0)
        h = h.astype(jnp.bfloat16)
    w = params["w4"].astype(jnp.bfloat16)
    return jnp.dot(h, w, preferred_element_type=jnp.float32) + params["b4"]


def reference_forward_f32(x, params):
    h = x
    for i in (1, 2, 3):
        h = jnp.maximum(h @ params[f"w{i}"] + params[f"b{i}"], 0.0)
    return h @ params["w4"] + params["b4"]


if __name__ == "__main__":
    # covtype: 54 input features, 7 classes. Small demo batch; tile_batch=32
    # forces 3 grid steps so the batch-tiled, ragged-free pipeline path is
    # exercised (production use would leave the default tile_batch=2048).
    input_dim, output_dim, batch = 54, 7, 96

    key = jax.random.PRNGKey(0)
    key, kx = jax.random.split(key)
    x = jax.random.normal(kx, (batch, input_dim), jnp.float32)
    params = init_params(key, input_dim, output_dim)

    out = mlp_forward(x, params, tile_batch=32)
    out = jax.block_until_ready(out)

    assert out.shape == (batch, output_dim)
    ref_bf16 = reference_forward_bf16(x, params)
    assert jnp.allclose(out, ref_bf16, atol=1e-3, rtol=1e-3), "mismatch vs bf16 reference"
    ref_f32 = reference_forward_f32(x, params)
    assert jnp.allclose(out, ref_f32, atol=1e-1, rtol=1e-1), "mismatch vs f32 reference"

    print("KERNEL_OK")
</pallas_src>

<mosaic_0001>
module attributes {stable_mosaic.version = 11 : i64} {
  func.func @mlp_kernel(%arg0: i32, %arg1: memref<32x54xf32, #tpu.memory_space<vmem>>, %arg2: memref<54x128xbf16, #tpu.memory_space<vmem>>, %arg3: memref<1x128xf32, #tpu.memory_space<vmem>>, %arg4: memref<128x128xbf16, #tpu.memory_space<vmem>>, %arg5: memref<1x128xf32, #tpu.memory_space<vmem>>, %arg6: memref<128x128xbf16, #tpu.memory_space<vmem>>, %arg7: memref<1x128xf32, #tpu.memory_space<vmem>>, %arg8: memref<128x8xbf16, #tpu.memory_space<vmem>>, %arg9: memref<1x8xf32, #tpu.memory_space<vmem>>, %arg10: memref<32x8xf32, #tpu.memory_space<vmem>>) attributes {dimension_semantics = [#tpu.dimension_semantics<parallel>], iteration_bounds = array<i64: 3>, scalar_prefetch = 0 : i64, scratch_operands = 0 : i64, tpu.core_type = #tpu.core_type<tc>, window_params = [{transform_indices = @transform_0, window_bounds = array<i64: 32, 54>}, {pipeline_mode = #tpu.pipeline_mode<synchronous>, transform_indices = @transform_1, window_bounds = array<i64: 54, 128>}, {pipeline_mode = #tpu.pipeline_mode<synchronous>, transform_indices = @transform_2, window_bounds = array<i64: 1, 128>}, {pipeline_mode = #tpu.pipeline_mode<synchronous>, transform_indices = @transform_3, window_bounds = array<i64: 128, 128>}, {pipeline_mode = #tpu.pipeline_mode<synchronous>, transform_indices = @transform_4, window_bounds = array<i64: 1, 128>}, {pipeline_mode = #tpu.pipeline_mode<synchronous>, transform_indices = @transform_5, window_bounds = array<i64: 128, 128>}, {pipeline_mode = #tpu.pipeline_mode<synchronous>, transform_indices = @transform_6, window_bounds = array<i64: 1, 128>}, {pipeline_mode = #tpu.pipeline_mode<synchronous>, transform_indices = @transform_7, window_bounds = array<i64: 128, 8>}, {pipeline_mode = #tpu.pipeline_mode<synchronous>, transform_indices = @transform_8, window_bounds = array<i64: 1, 8>}, {transform_indices = @transform_9, window_bounds = array<i64: 32, 8>}]} {
    %c0 = arith.constant 0 : index
    %c0_0 = arith.constant 0 : index
    %0 = vector.load %arg1[%c0, %c0_0] : memref<32x54xf32, #tpu.memory_space<vmem>>, vector<32x54xf32>
    %1 = arith.truncf %0 : vector<32x54xf32> to vector<32x54xbf16>
    %c0_1 = arith.constant 0 : index
    %c0_2 = arith.constant 0 : index
    %2 = vector.load %arg2[%c0_1, %c0_2] : memref<54x128xbf16, #tpu.memory_space<vmem>>, vector<54x128xbf16>
    %cst = arith.constant dense<0.000000e+00> : vector<32x128xf32>
    %3 = tpu.matmul %1, %2, %cst {dimension_numbers = #tpu.dot_dimension_numbers<[1], [0], [0], [1], [0, 0, 1, 1], [], []>} : vector<32x54xbf16>, vector<54x128xbf16>, vector<32x128xf32> -> vector<32x128xf32>
    %c0_3 = arith.constant 0 : index
    %c0_4 = arith.constant 0 : index
    %4 = vector.load %arg3[%c0_3, %c0_4] : memref<1x128xf32, #tpu.memory_space<vmem>>, vector<1x128xf32>
    %5 = vector.broadcast %4 : vector<1x128xf32> to vector<32x128xf32>
    %6 = arith.addf %3, %5 : vector<32x128xf32>
    %cst_5 = arith.constant 0.000000e+00 : f32
    %7 = vector.broadcast %cst_5 : f32 to vector<32x128xf32>
    %8 = arith.maximumf %6, %7 : vector<32x128xf32>
    %9 = arith.truncf %8 : vector<32x128xf32> to vector<32x128xbf16>
    %c0_6 = arith.constant 0 : index
    %c0_7 = arith.constant 0 : index
    %10 = vector.load %arg4[%c0_6, %c0_7] : memref<128x128xbf16, #tpu.memory_space<vmem>>, vector<128x128xbf16>
    %cst_8 = arith.constant dense<0.000000e+00> : vector<32x128xf32>
    %11 = tpu.matmul %9, %10, %cst_8 {dimension_numbers = #tpu.dot_dimension_numbers<[1], [0], [0], [1], [0, 0, 1, 1], [], []>} : vector<32x128xbf16>, vector<128x128xbf16>, vector<32x128xf32> -> vector<32x128xf32>
    %c0_9 = arith.constant 0 : index
    %c0_10 = arith.constant 0 : index
    %12 = vector.load %arg5[%c0_9, %c0_10] : memref<1x128xf32, #tpu.memory_space<vmem>>, vector<1x128xf32>
    %13 = vector.broadcast %12 : vector<1x128xf32> to vector<32x128xf32>
    %14 = arith.addf %11, %13 : vector<32x128xf32>
    %cst_11 = arith.constant 0.000000e+00 : f32
    %15 = vector.broadcast %cst_11 : f32 to vector<32x128xf32>
    %16 = arith.maximumf %14, %15 : vector<32x128xf32>
    %17 = arith.truncf %16 : vector<32x128xf32> to vector<32x128xbf16>
    %c0_12 = arith.constant 0 : index
    %c0_13 = arith.constant 0 : index
    %18 = vector.load %arg6[%c0_12, %c0_13] : memref<128x128xbf16, #tpu.memory_space<vmem>>, vector<128x128xbf16>
    %cst_14 = arith.constant dense<0.000000e+00> : vector<32x128xf32>
    %19 = tpu.matmul %17, %18, %cst_14 {dimension_numbers = #tpu.dot_dimension_numbers<[1], [0], [0], [1], [0, 0, 1, 1], [], []>} : vector<32x128xbf16>, vector<128x128xbf16>, vector<32x128xf32> -> vector<32x128xf32>
    %c0_15 = arith.constant 0 : index
    %c0_16 = arith.constant 0 : index
    %20 = vector.load %arg7[%c0_15, %c0_16] : memref<1x128xf32, #tpu.memory_space<vmem>>, vector<1x128xf32>
    %21 = vector.broadcast %20 : vector<1x128xf32> to vector<32x128xf32>
    %22 = arith.addf %19, %21 : vector<32x128xf32>
    %cst_17 = arith.constant 0.000000e+00 : f32
    %23 = vector.broadcast %cst_17 : f32 to vector<32x128xf32>
    %24 = arith.maximumf %22, %23 : vector<32x128xf32>
    %25 = arith.truncf %24 : vector<32x128xf32> to vector<32x128xbf16>
    %c0_18 = arith.constant 0 : index
    %c0_19 = arith.constant 0 : index
    %26 = vector.load %arg8[%c0_18, %c0_19] : memref<128x8xbf16, #tpu.memory_space<vmem>>, vector<128x8xbf16>
    %cst_20 = arith.constant dense<0.000000e+00> : vector<32x8xf32>
    %27 = tpu.matmul %25, %26, %cst_20 {dimension_numbers = #tpu.dot_dimension_numbers<[1], [0], [0], [1], [0, 0, 1, 1], [], []>} : vector<32x128xbf16>, vector<128x8xbf16>, vector<32x8xf32> -> vector<32x8xf32>
    %c0_21 = arith.constant 0 : index
    %c0_22 = arith.constant 0 : index
    %28 = vector.load %arg9[%c0_21, %c0_22] : memref<1x8xf32, #tpu.memory_space<vmem>>, vector<1x8xf32>
    %29 = vector.broadcast %28 : vector<1x8xf32> to vector<32x8xf32>
    %30 = arith.addf %27, %29 : vector<32x8xf32>
    %c0_23 = arith.constant 0 : index
    %c0_24 = arith.constant 0 : index
    %31 = vector.load %arg10[%c0_23, %c0_24] : memref<32x8xf32, #tpu.memory_space<vmem>>, vector<32x8xf32>
    tpu.vector_store %arg10[%c0_23, %c0_24], %30 {strides = array<i32>} : memref<32x8xf32, #tpu.memory_space<vmem>>, vector<32x8xf32>,
    return
  }
  func.func @transform_0(%arg0: i32) -> (i32, i32) {
    %c0_i32 = arith.constant 0 : i32
    %c0_i32_0 = arith.constant 0 : i32
    return %arg0, %c0_i32 : i32, i32
  }
  func.func @transform_1(%arg0: i32) -> (i32, i32) {
    %c0_i32 = arith.constant 0 : i32
    %c0_i32_0 = arith.constant 0 : i32
    %c0_i32_1 = arith.constant 0 : i32
    return %c0_i32, %c0_i32_0 : i32, i32
  }
  func.func @transform_2(%arg0: i32) -> (i32, i32) {
    %c0_i32 = arith.constant 0 : i32
    %c0_i32_0 = arith.constant 0 : i32
    %c0_i32_1 = arith.constant 0 : i32
    return %c0_i32, %c0_i32_0 : i32, i32
  }
  func.func @transform_3(%arg0: i32) -> (i32, i32) {
    %c0_i32 = arith.constant 0 : i32
    %c0_i32_0 = arith.constant 0 : i32
    %c0_i32_1 = arith.constant 0 : i32
    return %c0_i32, %c0_i32_0 : i32, i32
  }
  func.func @transform_4(%arg0: i32) -> (i32, i32) {
    %c0_i32 = arith.constant 0 : i32
    %c0_i32_0 = arith.constant 0 : i32
    %c0_i32_1 = arith.constant 0 : i32
    return %c0_i32, %c0_i32_0 : i32, i32
  }
  func.func @transform_5(%arg0: i32) -> (i32, i32) {
    %c0_i32 = arith.constant 0 : i32
    %c0_i32_0 = arith.constant 0 : i32
    %c0_i32_1 = arith.constant 0 : i32
    return %c0_i32, %c0_i32_0 : i32, i32
  }
  func.func @transform_6(%arg0: i32) -> (i32, i32) {
    %c0_i32 = arith.constant 0 : i32
    %c0_i32_0 = arith.constant 0 : i32
    %c0_i32_1 = arith.constant 0 : i32
    return %c0_i32, %c0_i32_0 : i32, i32
  }
  func.func @transform_7(%arg0: i32) -> (i32, i32) {
    %c0_i32 = arith.constant 0 : i32
    %c0_i32_0 = arith.constant 0 : i32
    %c0_i32_1 = arith.constant 0 : i32
    return %c0_i32, %c0_i32_0 : i32, i32
  }
  func.func @transform_8(%arg0: i32) -> (i32, i32) {
    %c0_i32 = arith.constant 0 : i32
    %c0_i32_0 = arith.constant 0 : i32
    %c0_i32_1 = arith.constant 0 : i32
    return %c0_i32, %c0_i32_0 : i32, i32
  }
  func.func @transform_9(%arg0: i32) -> (i32, i32) {
    %c0_i32 = arith.constant 0 : i32
    %c0_i32_0 = arith.constant 0 : i32
    return %arg0, %c0_i32 : i32, i32
  }
}

</mosaic_0001>

<llo_original>
// kernel: tpu_custom_call.1
$region0: #{tpu_custom_call.1}
  #allocation0 [shape = 'u32[]', space=smem, size = 0x4, offset = 0x4, fixed_abs, tag = 'smem constant byte address 0x4 - core index']
  #allocation1 [shape = 'u32[72,128]{1,0:T(1,128)}', space=vmem, size = 0x9000, scoped, tag = 'internal scratch']
  %s0 = inlined_call_operand.vmem [shape: f32[96,54], index: 0, kind: input, shape index: {}]
  %s1 = inlined_call_operand.vmem [shape: bf16[54,128], index: 1, kind: input, shape index: {}]
  %s2 = inlined_call_operand.vmem [shape: f32[1,128], index: 2, kind: input, shape index: {}]
  %s3 = inlined_call_operand.vmem [shape: bf16[128,128], index: 3, kind: input, shape index: {}]
  %s4 = inlined_call_operand.vmem [shape: f32[1,128], index: 4, kind: input, shape index: {}]
  %s5 = inlined_call_operand.vmem [shape: bf16[128,128], index: 5, kind: input, shape index: {}]
  %s6 = inlined_call_operand.vmem [shape: f32[1,128], index: 6, kind: input, shape index: {}]
  %s7 = inlined_call_operand.vmem [shape: bf16[128,8], index: 7, kind: input, shape index: {}]
  %s8 = inlined_call_operand.vmem [shape: f32[1,8], index: 8, kind: input, shape index: {}]
  %s9 = inlined_call_operand.vmem [shape: f32[96,8], index: 9, kind: output, shape index: {}]
  %s10 = sld [smem:[#allocation0]]
  $region69: #{tpu_custom_call.1} parent=0
    _
  %s12 = ssub.s32 1, %s10
  %s13 = scalar_select 0, %s12, %s10
  loop: start=0, step=1, limit=5
  $region2: #{tpu_custom_call.1} parent=0 // loop_pre_header
    _
  $region3: #{tpu_custom_call.1} parent=0 // loop_header
    %s15 = sphi 0, %s19
    %p16 = scmp.ge.s32.totalorder %s15, 5
    %s25 = sphi 0, %s27
    %s28 = sphi 0, %s25
    %s29 = sphi 0, %s28
    %s45 = sphi 0, %s29
    %s49 = sphi 0, %s49
    %s51 = sphi 0, %s49
    %s52 = sphi 0, %s51
    %s66 = sphi 0, %s52
    %s70 = sphi 0, %s70
    %s72 = sphi 0, %s70
    %s73 = sphi 0, %s72
    %s87 = sphi 0, %s73
    %s91 = sphi 0, %s91
    %s93 = sphi 0, %s91
    %s94 = sphi 0, %s93
    %s108 = sphi 0, %s94
    %s112 = sphi 0, %s112
    %s114 = sphi 0, %s112
    %s115 = sphi 0, %s114
    %s129 = sphi 0, %s115
    %s133 = sphi 0, %s133
    %s135 = sphi 0, %s133
    %s136 = sphi 0, %s135
    %s150 = sphi 0, %s136
    %s154 = sphi 0, %s154
    %s156 = sphi 0, %s154
    %s157 = sphi 0, %s156
    %s171 = sphi 0, %s157
    %s175 = sphi 0, %s175
    %s177 = sphi 0, %s175
    %s178 = sphi 0, %s177
    %s192 = sphi 0, %s178
    %s196 = sphi 0, %s196
    %s198 = sphi 0, %s196
    %s199 = sphi 0, %s198
    %s213 = sphi 0, %s199
    %s219 = sphi 0, %s221
    %s222 = sphi 0, %s219
    %s223 = sphi 0, %s222
    %s239 = sphi 0, %s223
  $region4: #{tpu_custom_call.1} parent=0 // loop_header_branch
    %18 = sbr.rel (%p16) target = $region8
  $region5: #{tpu_custom_call.1} parent=0 // loop_body
    %s20 = ssub.s32 %s15, 1
    %s21 = ssub.s32 %s15, 2
    %s22 = sadd.s32 %s15, 1
    %s23 = ssub.s32 %s15, %s22
    %p24 = scmp.eq.s32.totalorder %s23, 0
    %s26 = sadd.s32 %s25, 1
    %s27 = scalar_select %p24, %s25, %s26
    %p30 = pneg %p24
    %p31 = scmp.eq.s32.totalorder %s15, 2
    %p32 = por %p30, %p31
    %p33 = scmp.ne.s32.totalorder %s25, %s28
    %p34 = scmp.eq.s32.totalorder %s15, 0
    %p35 = por %p33, %p34
    %p36 = scmp.ne.s32.totalorder %s25, %s28
    %p37 = scmp.eq.s32.totalorder %s20, 2
    %p38 = por %p36, %p37
    %p39 = scmp.ne.s32.totalorder %s28, %s29
    %p40 = scmp.eq.s32.totalorder %s20, 0
    %p41 = por %p39, %p40
    %p42 = scmp.ne.s32.totalorder %s28, %s29
    %p43 = scmp.eq.s32.totalorder %s21, 2
    %p44 = por %p42, %p43
    %p46 = scmp.ne.s32.totalorder %s29, %s45
    %p47 = scmp.eq.s32.totalorder %s21, 0
    %p48 = por %p46, %p47
    %s50 = sadd.s32 %s49, 1
    %p53 = scmp.eq.s32.totalorder %s15, 2
    %p54 = scmp.ne.s32.totalorder %s49, %s51
    %p55 = scmp.eq.s32.totalorder %s15, 0
    %p56 = por %p54, %p55
    %p57 = scmp.ne.s32.totalorder %s49, %s51
    %p58 = scmp.eq.s32.totalorder %s20, 2
    %p59 = por %p57, %p58
    %p60 = scmp.ne.s32.totalorder %s51, %s52
    %p61 = scmp.eq.s32.totalorder %s20, 0
    %p62 = por %p60, %p61
    %p63 = scmp.ne.s32.totalorder %s51, %s52
    %p64 = scmp.eq.s32.totalorder %s21, 2
    %p65 = por %p63, %p64
    %p67 = scmp.ne.s32.totalorder %s52, %s66
    %p68 = scmp.eq.s32.totalorder %s21, 0
    %p69 = por %p67, %p68
    %s71 = sadd.s32 %s70, 1
    %p74 = scmp.eq.s32.totalorder %s15, 2
    %p75 = scmp.ne.s32.totalorder %s70, %s72
    %p76 = scmp.eq.s32.totalorder %s15, 0
    %p77 = por %p75, %p76
    %p78 = scmp.ne.s32.totalorder %s70, %s72
    %p79 = scmp.eq.s32.totalorder %s20, 2
    %p80 = por %p78, %p79
    %p81 = scmp.ne.s32.totalorder %s72, %s73
    %p82 = scmp.eq.s32.totalorder %s20, 0
    %p83 = por %p81, %p82
    %p84 = scmp.ne.s32.totalorder %s72, %s73
    %p85 = scmp.eq.s32.totalorder %s21, 2
    %p86 = por %p84, %p85
    %p88 = scmp.ne.s32.totalorder %s73, %s87
    %p89 = scmp.eq.s32.totalorder %s21, 0
    %p90 = por %p88, %p89
    %s92 = sadd.s32 %s91, 1
    %p95 = scmp.eq.s32.totalorder %s15, 2
    %p96 = scmp.ne.s32.totalorder %s91, %s93
    %p97 = scmp.eq.s32.totalorder %s15, 0
    %p98 = por %p96, %p97
    %p99 = scmp.ne.s32.totalorder %s91, %s93
    %p100 = scmp.eq.s32.totalorder %s20, 2
    %p101 = por %p99, %p100
    %p102 = scmp.ne.s32.totalorder %s93, %s94
    %p103 = scmp.eq.s32.totalorder %s20, 0
    %p104 = por %p102, %p103
    %p105 = scmp.ne.s32.totalorder %s93, %s94
    %p106 = scmp.eq.s32.totalorder %s21, 2
    %p107 = por %p105, %p106
    %p109 = scmp.ne.s32.totalorder %s94, %s108
    %p110 = scmp.eq.s32.totalorder %s21, 0
    %p111 = por %p109, %p110
    %s113 = sadd.s32 %s112, 1
    %p116 = scmp.eq.s32.totalorder %s15, 2
    %p117 = scmp.ne.s32.totalorder %s112, %s114
    %p118 = scmp.eq.s32.totalorder %s15, 0
    %p119 = por %p117, %p118
    %p120 = scmp.ne.s32.totalorder %s112, %s114
    %p121 = scmp.eq.s32.totalorder %s20, 2
    %p122 = por %p120, %p121
    %p123 = scmp.ne.s32.totalorder %s114, %s115
    %p124 = scmp.eq.s32.totalorder %s20, 0
    %p125 = por %p123, %p124
    %p126 = scmp.ne.s32.totalorder %s114, %s115
    %p127 = scmp.eq.s32.totalorder %s21, 2
    %p128 = por %p126, %p127
    %p130 = scmp.ne.s32.totalorder %s115, %s129
    %p131 = scmp.eq.s32.totalorder %s21, 0
    %p132 = por %p130, %p131
    %s134 = sadd.s32 %s133, 1
    %p137 = scmp.eq.s32.totalorder %s15, 2
    %p138 = scmp.ne.s32.totalorder %s133, %s135
    %p139 = scmp.eq.s32.totalorder %s15, 0
    %p140 = por %p138, %p139
    %p141 = scmp.ne.s32.totalorder %s133, %s135
    %p142 = scmp.eq.s32.totalorder %s20, 2
    %p143 = por %p141, %p142
    %p144 = scmp.ne.s32.totalorder %s135, %s136
    %p145 = scmp.eq.s32.totalorder %s20, 0
    %p146 = por %p144, %p145
    %p147 = scmp.ne.s32.totalorder %s135, %s136
    %p148 = scmp.eq.s32.totalorder %s21, 2
    %p149 = por %p147, %p148
    %p151 = scmp.ne.s32.totalorder %s136, %s150
    %p152 = scmp.eq.s32.totalorder %s21, 0
    %p153 = por %p151, %p152
    %s155 = sadd.s32 %s154, 1
    %p158 = scmp.eq.s32.totalorder %s15, 2
    %p159 = scmp.ne.s32.totalorder %s154, %s156
    %p160 = scmp.eq.s32.totalorder %s15, 0
    %p161 = por %p159, %p160
    %p162 = scmp.ne.s32.totalorder %s154, %s156
    %p163 = scmp.eq.s32.totalorder %s20, 2
    %p164 = por %p162, %p163
    %p165 = scmp.ne.s32.totalorder %s156, %s157
    %p166 = scmp.eq.s32.totalorder %s20, 0
    %p167 = por %p165, %p166
    %p168 = scmp.ne.s32.totalorder %s156, %s157
    %p169 = scmp.eq.s32.totalorder %s21, 2
    %p170 = por %p168, %p169
    %p172 = scmp.ne.s32.totalorder %s157, %s171
    %p173 = scmp.eq.s32.totalorder %s21, 0
    %p174 = por %p172, %p173
    %s176 = sadd.s32 %s175, 1
    %p179 = scmp.eq.s32.totalorder %s15, 2
    %p180 = scmp.ne.s32.totalorder %s175, %s177
    %p181 = scmp.eq.s32.totalorder %s15, 0
    %p182 = por %p180, %p181
    %p183 = scmp.ne.s32.totalorder %s175, %s177
    %p184 = scmp.eq.s32.totalorder %s20, 2
    %p185 = por %p183, %p184
    %p186 = scmp.ne.s32.totalorder %s177, %s178
    %p187 = scmp.eq.s32.totalorder %s20, 0
    %p188 = por %p186, %p187
    %p189 = scmp.ne.s32.totalorder %s177, %s178
    %p190 = scmp.eq.s32.totalorder %s21, 2
    %p191 = por %p189, %p190
    %p193 = scmp.ne.s32.totalorder %s178, %s192
    %p194 = scmp.eq.s32.totalorder %s21, 0
    %p195 = por %p193, %p194
    %s197 = sadd.s32 %s196, 1
    %p200 = scmp.eq.s32.totalorder %s15, 2
    %p201 = scmp.ne.s32.totalorder %s196, %s198
    %p202 = scmp.eq.s32.totalorder %s15, 0
    %p203 = por %p201, %p202
    %p204 = scmp.ne.s32.totalorder %s196, %s198
    %p205 = scmp.eq.s32.totalorder %s20, 2
    %p206 = por %p204, %p205
    %p207 = scmp.ne.s32.totalorder %s198, %s199
    %p208 = scmp.eq.s32.totalorder %s20, 0
    %p209 = por %p207, %p208
    %p210 = scmp.ne.s32.totalorder %s198, %s199
    %p211 = scmp.eq.s32.totalorder %s21, 2
    %p212 = por %p210, %p211
    %p214 = scmp.ne.s32.totalorder %s199, %s213
    %p215 = scmp.eq.s32.totalorder %s21, 0
    %p216 = por %p214, %p215
    %s217 = ssub.s32 %s15, %s22
    %p218 = scmp.eq.s32.totalorder %s217, 0
    %s220 = sadd.s32 %s219, 1
    %s221 = scalar_select %p218, %s219, %s220
    %p224 = pneg %p218
    %p225 = scmp.eq.s32.totalorder %s15, 2
    %p226 = por %p224, %p225
    %p227 = scmp.ne.s32.totalorder %s219, %s222
    %p228 = scmp.eq.s32.totalorder %s15, 0
    %p229 = por %p227, %p228
    %p230 = scmp.ne.s32.totalorder %s219, %s222
    %p231 = scmp.eq.s32.totalorder %s20, 2
    %p232 = por %p230, %p231
    %p233 = scmp.ne.s32.totalorder %s222, %s223
    %p234 = scmp.eq.s32.totalorder %s20, 0
    %p235 = por %p233, %p234
    %p236 = scmp.ne.s32.totalorder %s222, %s223
    %p237 = scmp.eq.s32.totalorder %s21, 2
    %p238 = por %p236, %p237
    %p240 = scmp.ne.s32.totalorder %s223, %s239
    %p241 = scmp.eq.s32.totalorder %s21, 0
    %p242 = por %p240, %p241
    %p243 = scmp.le.s32.totalorder 1, %s15
    %p244 = scmp.lt.s32.totalorder %s15, 4
    %p245 = pnand %p243, %p244
    %p246 = pneg %p245
    // Predicated region
    $region9: #{tpu_custom_call.1} parent=5 // pred_check
      _
    $region10: #{tpu_custom_call.1} parent=5 // pred_check_branch
      %248 = sbr.rel (%p245) target = $region12
    $region11: #{tpu_custom_call.1} parent=5 // pred_region
      %s249 = ssub.s32 %s15, 1
      // Predicated region
      $region13: #{tpu_custom_call.1} parent=11 // pred_check
        %p250 = pneg %p62
      $region14: #{tpu_custom_call.1} parent=11 // pred_check_branch
        %252 = sbr.rel (%p250) target = $region16
      $region15: #{tpu_custom_call.1} parent=11 // pred_region
        _
      $region16: #{tpu_custom_call.1} parent=11 // pred_fallthru
        _
      // Predicated region
      $region17: #{tpu_custom_call.1} parent=11 // pred_check
        %p253 = pneg %p83
      $region18: #{tpu_custom_call.1} parent=11 // pred_check_branch
        %255 = sbr.rel (%p253) target = $region20
      $region19: #{tpu_custom_call.1} parent=11 // pred_region
        _
      $region20: #{tpu_custom_call.1} parent=11 // pred_fallthru
        _
      // Predicated region
      $region21: #{tpu_custom_call.1} parent=11 // pred_check
        %p256 = pneg %p104
      $region22: #{tpu_custom_call.1} parent=11 // pred_check_branch
        %258 = sbr.rel (%p256) target = $region24
      $region23: #{tpu_custom_call.1} parent=11 // pred_region
        _
      $region24: #{tpu_custom_call.1} parent=11 // pred_fallthru
        _
      // Predicated region
      $region25: #{tpu_custom_call.1} parent=11 // pred_check
        %p259 = pneg %p125
      $region26: #{tpu_custom_call.1} parent=11 // pred_check_branch
        %261 = sbr.rel (%p259) target = $region28
      $region27: #{tpu_custom_call.1} parent=11 // pred_region
        _
      $region28: #{tpu_custom_call.1} parent=11 // pred_fallthru
        _
      // Predicated region
      $region29: #{tpu_custom_call.1} parent=11 // pred_check
        %p262 = pneg %p146
      $region30: #{tpu_custom_call.1} parent=11 // pred_check_branch
        %264 = sbr.rel (%p262) target = $region32
      $region31: #{tpu_custom_call.1} parent=11 // pred_region
        _
      $region32: #{tpu_custom_call.1} parent=11 // pred_fallthru
        _
      // Predicated region
      $region33: #{tpu_custom_call.1} parent=11 // pred_check
        %p265 = pneg %p167
      $region34: #{tpu_custom_call.1} parent=11 // pred_check_branch
        %267 = sbr.rel (%p265) target = $region36
      $region35: #{tpu_custom_call.1} parent=11 // pred_region
        _
      $region36: #{tpu_custom_call.1} parent=11 // pred_fallthru
        _
      // Predicated region
      $region37: #{tpu_custom_call.1} parent=11 // pred_check
        %p268 = pneg %p188
      $region38: #{tpu_custom_call.1} parent=11 // pred_check_branch
        %270 = sbr.rel (%p268) target = $region40
      $region39: #{tpu_custom_call.1} parent=11 // pred_region
        _
      $region40: #{tpu_custom_call.1} parent=11 // pred_fallthru
        _
      // Predicated region
      $region41: #{tpu_custom_call.1} parent=11 // pred_check
        %p271 = pneg %p209
      $region42: #{tpu_custom_call.1} parent=11 // pred_check_branch
        %273 = sbr.rel (%p271) target = $region44
      $region43: #{tpu_custom_call.1} parent=11 // pred_region
        _
      $region44: #{tpu_custom_call.1} parent=11 // pred_fallthru
        _
    $region12: #{tpu_custom_call.1} parent=5 // pred_fallthru
      _
    %p274 = scmp.lt.s32.totalorder %s15, 3
    // Predicated region
    $region45: #{tpu_custom_call.1} parent=5 // pred_check
      %p275 = pneg %p274
    $region46: #{tpu_custom_call.1} parent=5 // pred_check_branch
      %277 = sbr.rel (%p275) target = $region48
    $region47: #{tpu_custom_call.1} parent=5 // pred_region
      // Predicated region
      $region49: #{tpu_custom_call.1} parent=47 // pred_check
        %p278 = pneg %p35
      $region50: #{tpu_custom_call.1} parent=47 // pred_check_branch
        %280 = sbr.rel (%p278) target = $region52
      $region51: #{tpu_custom_call.1} parent=47 // pred_region
        %s281 = smul.u32 4, %s15
        %p282 = scmp.lt.s32.totalorder %s281, 11
        %s283 = scalar_select %p282, %s281, 11
        %s284 = smul.addr %s283, 8
        %s285 = scalar_lea.vmem %s0, %s284
        %s286 = smul.u32 4, %s15
      $region52: #{tpu_custom_call.1} parent=47 // pred_fallthru
        _
    $region48: #{tpu_custom_call.1} parent=5 // pred_fallthru
      _
    %p287 = scmp.le.s32.totalorder 1, %s15
    %p288 = scmp.lt.s32.totalorder %s15, 4
    %p289 = pnand %p287, %p288
    %p290 = pneg %p289
    // Predicated region
    $region53: #{tpu_custom_call.1} parent=5 // pred_check
      _
    $region54: #{tpu_custom_call.1} parent=5 // pred_check_branch
      %292 = sbr.rel (%p289) target = $region56
    $region55: #{tpu_custom_call.1} parent=5 // pred_region
      %s293 = ssub.s32 %s15, 1
      %s294 = smul.u32 4, %s20
      %p295 = scmp.lt.s32.totalorder %s294, 11
      %s296 = scalar_select %p295, %s294, 11
      %s297 = smul.addr %s296, 8
      %s298 = scalar_lea.vmem %s0, %s297
      %p299 = pneg %p41
      %p300 = pneg %p38
      %p301 = pneg %p62
      %p302 = pneg %p59
      %p303 = pneg %p83
      %p304 = pneg %p80
      %p305 = pneg %p104
      %p306 = pneg %p101
      %p307 = pneg %p125
      %p308 = pneg %p122
      %p309 = pneg %p146
      %p310 = pneg %p143
      %p311 = pneg %p167
      %p312 = pneg %p164
      %p313 = pneg %p188
      %p314 = pneg %p185
      %p315 = pneg %p209
      %p316 = pneg %p206
      %p317 = pneg %p235
      %p318 = pneg %p232
      %s319 = smul.u32 4, %s20
      %p320 = scmp.lt.s32.totalorder %s319, 11
      %s321 = scalar_select %p320, %s319, 11
      %s322 = smul.addr %s321, 8
      %s323 = scalar_lea.vmem %s9, %s322
      %s324 = smul.u32 4, %s20
      %p325 = scmp.lt.s32.totalorder %s324, 11
      %s326 = scalar_select %p325, %s324, 11
      %s327 = smul.addr %s326, 8
      %s328 = scalar_lea.vmem %s0, %s327
      %s329 = smul.u32 4, %s20
      %s330 = smul.u32 4, %s20
      %p331 = scmp.lt.s32.totalorder %s330, 11
      %s332 = scalar_select %p331, %s330, 11
      %s333 = smul.addr %s332, 8
      %s334 = scalar_lea.vmem %s9, %s333
      %s335 = smul.u32 4, %s20
      %v337 = vld [vmem:[%s328] sm:$0xff]
      %v338 = vld [vmem:[%s328 + $0x8] sm:$0xff]
      %v339 = vld [vmem:[%s328 + $0x10] sm:$0xff]
      %v340 = vld [vmem:[%s328 + $0x18] sm:$0xff]
      %v341 = vpack.c.bf16 %v338, %v337
      %v342 = vpack.c.bf16 %v340, %v339
      %v343 = vld [vmem:[%s1] sm:$0xf]
      %v344 = vld [vmem:[%s1 + $0x4] sm:$0xf]
      %v345 = vld [vmem:[%s1 + $0x8] sm:$0xf]
      %v346 = vld [vmem:[%s1 + $0xc] sm:$0xf]
      %v347 = vld [vmem:[%s1 + $0x10] sm:$0xf]
      %v348 = vld [vmem:[%s1 + $0x14] sm:$0xf]
      %v349 = vld [vmem:[%s1 + $0x18] sm:$0x7]
      %v350 = vld [vmem:[%s2] sm:$0x1]
      %v352 = vperm.slane %v350, 0
      %v361 = vunpack.c.l.b16 %v343
      %v362 = vunpack.c.l.b16 %v344
      %v363 = vunpack.c.l.b16 %v345
      %v364 = vunpack.c.l.b16 %v346
      %v365 = vunpack.c.l.b16 %v347
      %v366 = vunpack.c.l.b16 %v348
      %v367 = vunpack.c.l.b16 %v349
      %v368 = vpack.c.b16 %v362, %v361
      %v369 = vpack.c.b16 %v364, %v363
      %v370 = vpack.c.b16 %v366, %v365
      %v371 = vpack.c.b16 %v367, %v367
      %vm375 = vcmask 441344
      %v377 = vsel %vm375, %v341, 0
      %v380 = vsel %vm375, %v342, 0
      %vm382 = vcmask 1042432
      %v384 = vsel %vm382, %v371, 0
      %386 = vmatpush.bf16.msra.mxu0 0
      %387 = vmatpush.bf16.msra.mxu0 0
      %388 = vmatpush.bf16.msra.mxu0 0
      %389 = vmatpush.bf16.msra.mxu0 0
      %390 = vmatpush.bf16.msra.mxu0 %v384
      %391 = vmatpush.bf16.msra.mxu0 %v370
      %392 = vmatpush.bf16.msra.mxu0 %v369
      %393 = vmatpush.bf16.msra.mxu0 %v368
      %394 = vmatmul.bf16.gmra.mxu0 %v377
      %v395 = vpop.f32.mrf.mxu0
      %v396 = vadd.f32 %v352, %v395
      %v397 = vpop.f32.mrf.mxu0
      %v398 = vadd.f32 %v352, %v397
      %399 = vmatmul.bf16.gmra.mxu0 %v380
      %v400 = vpop.f32.mrf.mxu0
      %v401 = vadd.f32 %v352, %v400
      %v402 = vpop.f32.mrf.mxu0
      %v403 = vadd.f32 %v352, %v402
      %404 = vdwg.mxu0
      %v405 = vmax.f32 %v396, 0.0
      %v406 = vmax.f32 %v398, 0.0
      %v407 = vmax.f32 %v401, 0.0
      %v408 = vmax.f32 %v403, 0.0
      %v409 = vpack.c.bf16 %v406, %v405
      %v410 = vpack.c.bf16 %v408, %v407
      %v411 = vld [vmem:[%s3] sm:$0xf]
      %v412 = vld [vmem:[%s3 + $0x4] sm:$0xf]
      %v413 = vld [vmem:[%s3 + $0x8] sm:$0xf]
      %v414 = vld [vmem:[%s3 + $0xc] sm:$0xf]
      %v415 = vld [vmem:[%s3 + $0x10] sm:$0xf]
      %v416 = vld [vmem:[%s3 + $0x14] sm:$0xf]
      %v417 = vld [vmem:[%s3 + $0x18] sm:$0xf]
      %v418 = vld [vmem:[%s3 + $0x1c] sm:$0xf]
      %v419 = vld [vmem:[%s3 + $0x20] sm:$0xf]
      %v420 = vld [vmem:[%s3 + $0x24] sm:$0xf]
      %v421 = vld [vmem:[%s3 + $0x28] sm:$0xf]
      %v422 = vld [vmem:[%s3 + $0x2c] sm:$0xf]
      %v423 = vld [vmem:[%s3 + $0x30] sm:$0xf]
      %v424 = vld [vmem:[%s3 + $0x34] sm:$0xf]
      %v425 = vld [vmem:[%s3 + $0x38] sm:$0xf]
      %v426 = vld [vmem:[%s3 + $0x3c] sm:$0xf]
      %v427 = vld [vmem:[%s4] sm:$0x1]
      %v429 = vperm.slane %v427, 0
      %v447 = vunpack.c.l.b16 %v411
      %v448 = vunpack.c.l.b16 %v412
      %v449 = vunpack.c.l.b16 %v413
      %v450 = vunpack.c.l.b16 %v414
      %v451 = vunpack.c.l.b16 %v415
      %v452 = vunpack.c.l.b16 %v416
      %v453 = vunpack.c.l.b16 %v417
      %v454 = vunpack.c.l.b16 %v418
      %v455 = vunpack.c.l.b16 %v419
      %v456 = vunpack.c.l.b16 %v420
      %v457 = vunpack.c.l.b16 %v421
      %v458 = vunpack.c.l.b16 %v422
      %v459 = vunpack.c.l.b16 %v423
      %v460 = vunpack.c.l.b16 %v424
      %v461 = vunpack.c.l.b16 %v425
      %v462 = vunpack.c.l.b16 %v426
      %v463 = vpack.c.b16 %v448, %v447
      %v464 = vpack.c.b16 %v450, %v449
      %v465 = vpack.c.b16 %v452, %v451
      %v466 = vpack.c.b16 %v454, %v453
      %v467 = vpack.c.b16 %v456, %v455
      %v468 = vpack.c.b16 %v458, %v457
      %v469 = vpack.c.b16 %v460, %v459
      %v470 = vpack.c.b16 %v462, %v461
      %479 = vmatpush.bf16.msra.mxu0 %v470
      %480 = vmatpush.bf16.msra.mxu0 %v469
      %481 = vmatpush.bf16.msra.mxu0 %v468
      %482 = vmatpush.bf16.msra.mxu0 %v467
      %483 = vmatpush.bf16.msra.mxu0 %v466
      %484 = vmatpush.bf16.msra.mxu0 %v465
      %485 = vmatpush.bf16.msra.mxu0 %v464
      %486 = vmatpush.bf16.msra.mxu0 %v463
      %487 = vmatmul.bf16.gmra.mxu0 %v409
      %v488 = vpop.f32.mrf.mxu0
      %v489 = vadd.f32 %v429, %v488
      %v490 = vpop.f32.mrf.mxu0
      %v491 = vadd.f32 %v429, %v490
      %492 = vmatmul.bf16.gmra.mxu0 %v410
      %v493 = vpop.f32.mrf.mxu0
      %v494 = vadd.f32 %v429, %v493
      %v495 = vpop.f32.mrf.mxu0
      %v496 = vadd.f32 %v429, %v495
      %497 = vdwg.mxu0
      %v498 = vmax.f32 %v489, 0.0
      %v499 = vmax.f32 %v491, 0.0
      %v500 = vmax.f32 %v494, 0.0
      %v501 = vmax.f32 %v496, 0.0
      %v502 = vpack.c.bf16 %v499, %v498
      %v503 = vpack.c.bf16 %v501, %v500
      %v504 = vld [vmem:[%s5] sm:$0xf]
      %v505 = vld [vmem:[%s5 + $0x4] sm:$0xf]
      %v506 = vld [vmem:[%s5 + $0x8] sm:$0xf]
      %v507 = vld [vmem:[%s5 + $0xc] sm:$0xf]
      %v508 = vld [vmem:[%s5 + $0x10] sm:$0xf]
      %v509 = vld [vmem:[%s5 + $0x14] sm:$0xf]
      %v510 = vld [vmem:[%s5 + $0x18] sm:$0xf]
      %v511 = vld [vmem:[%s5 + $0x1c] sm:$0xf]
      %v512 = vld [vmem:[%s5 + $0x20] sm:$0xf]
      %v513 = vld [vmem:[%s5 + $0x24] sm:$0xf]
      %v514 = vld [vmem:[%s5 + $0x28] sm:$0xf]
      %v515 = vld [vmem:[%s5 + $0x2c] sm:$0xf]
      %v516 = vld [vmem:[%s5 + $0x30] sm:$0xf]
      %v517 = vld [vmem:[%s5 + $0x34] sm:$0xf]
      %v518 = vld [vmem:[%s5 + $0x38] sm:$0xf]
      %v519 = vld [vmem:[%s5 + $0x3c] sm:$0xf]
      %v520 = vld [vmem:[%s6] sm:$0x1]
      %v522 = vperm.slane %v520, 0
      %v540 = vunpack.c.l.b16 %v504
      %v541 = vunpack.c.l.b16 %v505
      %v542 = vunpack.c.l.b16 %v506
      %v543 = vunpack.c.l.b16 %v507
      %v544 = vunpack.c.l.b16 %v508
      %v545 = vunpack.c.l.b16 %v509
      %v546 = vunpack.c.l.b16 %v510
      %v547 = vunpack.c.l.b16 %v511
      %v548 = vunpack.c.l.b16 %v512
      %v549 = vunpack.c.l.b16 %v513
      %v550 = vunpack.c.l.b16 %v514
      %v551 = vunpack.c.l.b16 %v515
      %v552 = vunpack.c.l.b16 %v516
      %v553 = vunpack.c.l.b16 %v517
      %v554 = vunpack.c.l.b16 %v518
      %v555 = vunpack.c.l.b16 %v519
      %v556 = vpack.c.b16 %v541, %v540
      %v557 = vpack.c.b16 %v543, %v542
      %v558 = vpack.c.b16 %v545, %v544
      %v559 = vpack.c.b16 %v547, %v546
      %v560 = vpack.c.b16 %v549, %v548
      %v561 = vpack.c.b16 %v551, %v550
      %v562 = vpack.c.b16 %v553, %v552
      %v563 = vpack.c.b16 %v555, %v554
      %572 = vmatpush.bf16.msra.mxu0 %v563
      %573 = vmatpush.bf16.msra.mxu0 %v562
      %574 = vmatpush.bf16.msra.mxu0 %v561
      %575 = vmatpush.bf16.msra.mxu0 %v560
      %576 = vmatpush.bf16.msra.mxu0 %v559
      %577 = vmatpush.bf16.msra.mxu0 %v558
      %578 = vmatpush.bf16.msra.mxu0 %v557
      %579 = vmatpush.bf16.msra.mxu0 %v556
      %580 = vmatmul.bf16.gmra.mxu0 %v502
      %v581 = vpop.f32.mrf.mxu0
      %v582 = vadd.f32 %v522, %v581
      %v583 = vpop.f32.mrf.mxu0
      %v584 = vadd.f32 %v522, %v583
      %585 = vmatmul.bf16.gmra.mxu0 %v503
      %v586 = vpop.f32.mrf.mxu0
      %v587 = vadd.f32 %v522, %v586
      %v588 = vpop.f32.mrf.mxu0
      %v589 = vadd.f32 %v522, %v588
      %590 = vdwg.mxu0
      %v591 = vmax.f32 %v582, 0.0
      %v592 = vmax.f32 %v584, 0.0
      %v593 = vmax.f32 %v587, 0.0
      %v594 = vmax.f32 %v589, 0.0
      %v595 = vpack.c.bf16 %v592, %v591
      %v596 = vpack.c.bf16 %v594, %v593
      %v597 = vld [vmem:[%s7] sm:$0xf]
      %v598 = vld [vmem:[%s7 + $0x4] sm:$0xf]
      %v599 = vld [vmem:[%s7 + $0x8] sm:$0xf]
      %v600 = vld [vmem:[%s7 + $0xc] sm:$0xf]
      %v601 = vld [vmem:[%s7 + $0x10] sm:$0xf]
      %v602 = vld [vmem:[%s7 + $0x14] sm:$0xf]
      %v603 = vld [vmem:[%s7 + $0x18] sm:$0xf]
      %v604 = vld [vmem:[%s7 + $0x1c] sm:$0xf]
      %v605 = vld [vmem:[%s7 + $0x20] sm:$0xf]
      %v606 = vld [vmem:[%s7 + $0x24] sm:$0xf]
      %v607 = vld [vmem:[%s7 + $0x28] sm:$0xf]
      %v608 = vld [vmem:[%s7 + $0x2c] sm:$0xf]
      %v609 = vld [vmem:[%s7 + $0x30] sm:$0xf]
      %v610 = vld [vmem:[%s7 + $0x34] sm:$0xf]
      %v611 = vld [vmem:[%s7 + $0x38] sm:$0xf]
      %v612 = vld [vmem:[%s7 + $0x3c] sm:$0xf]
      %v613 = vld [vmem:[%s8] sm:$0x1]
      %v615 = vperm.slane %v613, 0
      %v633 = vunpack.c.l.b16 %v597
      %v634 = vunpack.c.l.b16 %v598
      %v635 = vunpack.c.l.b16 %v599
      %v636 = vunpack.c.l.b16 %v600
      %v637 = vunpack.c.l.b16 %v601
      %v638 = vunpack.c.l.b16 %v602
      %v639 = vunpack.c.l.b16 %v603
      %v640 = vunpack.c.l.b16 %v604
      %v641 = vunpack.c.l.b16 %v605
      %v642 = vunpack.c.l.b16 %v606
      %v643 = vunpack.c.l.b16 %v607
      %v644 = vunpack.c.l.b16 %v608
      %v645 = vunpack.c.l.b16 %v609
      %v646 = vunpack.c.l.b16 %v610
      %v647 = vunpack.c.l.b16 %v611
      %v648 = vunpack.c.l.b16 %v612
      %v649 = vpack.c.b16 %v634, %v633
      %v650 = vpack.c.b16 %v636, %v635
      %v651 = vpack.c.b16 %v638, %v637
      %v652 = vpack.c.b16 %v640, %v639
      %v653 = vpack.c.b16 %v642, %v641
      %v654 = vpack.c.b16 %v644, %v643
      %v655 = vpack.c.b16 %v646, %v645
      %v656 = vpack.c.b16 %v648, %v647
      %665 = vmatpush.bf16.msra.mxu0 %v656
      %666 = vmatpush.bf16.msra.mxu0 %v655
      %667 = vmatpush.bf16.msra.mxu0 %v654
      %668 = vmatpush.bf16.msra.mxu0 %v653
      %669 = vmatpush.bf16.msra.mxu0 %v652
      %670 = vmatpush.bf16.msra.mxu0 %v651
      %671 = vmatpush.bf16.msra.mxu0 %v650
      %672 = vmatpush.bf16.msra.mxu0 %v649
      %673 = vmatmul.bf16.gmra.mxu0 %v595
      %v674 = vpop.f32.mrf.mxu0
      %v675 = vadd.f32 %v615, %v674
      %v676 = vpop.f32.mrf.mxu0
      %v677 = vadd.f32 %v615, %v676
      %678 = vmatmul.bf16.gmra.mxu0 %v596
      %v679 = vpop.f32.mrf.mxu0
      %v680 = vadd.f32 %v615, %v679
      %v681 = vpop.f32.mrf.mxu0
      %v682 = vadd.f32 %v615, %v681
      %683 = vdwg.mxu0
      %vm684 = vcmask 64512
      %685 = vst.msk [vmem:[%s334] sm:$0xff] %vm684, %v675
      %686 = vst.msk [vmem:[%s334 + $0x8] sm:$0xff] %vm684, %v677
      %687 = vst.msk [vmem:[%s334 + $0x10] sm:$0xff] %vm684, %v680
      %688 = vst.msk [vmem:[%s334 + $0x18] sm:$0xff] %vm684, %v682
      %s689 = smul.u32 4, %s20
      %p690 = scmp.lt.s32.totalorder %s689, 11
      %s691 = scalar_select %p690, %s689, 11
      %s692 = smul.addr %s691, 8
      %s693 = scalar_lea.vmem %s9, %s692
      // Predicated region
      $region57: #{tpu_custom_call.1} parent=55 // pred_check
        %p694 = pneg %p232
      $region58: #{tpu_custom_call.1} parent=55 // pred_check_branch
        %696 = sbr.rel (%p694) target = $region60
      $region59: #{tpu_custom_call.1} parent=55 // pred_region
        %s697 = smul.u32 4, %s20
      $region60: #{tpu_custom_call.1} parent=55 // pred_fallthru
        _
    $region56: #{tpu_custom_call.1} parent=5 // pred_fallthru
      _
    %p698 = scmp.le.s32.totalorder 2, %s15
    // Predicated region
    $region61: #{tpu_custom_call.1} parent=5 // pred_check
      %p699 = pneg %p698
    $region62: #{tpu_custom_call.1} parent=5 // pred_check_branch
      %701 = sbr.rel (%p699) target = $region64
    $region63: #{tpu_custom_call.1} parent=5 // pred_region
      %s702 = ssub.s32 %s15, 2
      // Predicated region
      $region65: #{tpu_custom_call.1} parent=63 // pred_check
        %p703 = pneg %p238
      $region66: #{tpu_custom_call.1} parent=63 // pred_check_branch
        %705 = sbr.rel (%p703) target = $region68
      $region67: #{tpu_custom_call.1} parent=63 // pred_region
        %s706 = smul.u32 4, %s21
        %p707 = scmp.lt.s32.totalorder %s706, 11
        %s708 = scalar_select %p707, %s706, 11
        %s709 = smul.addr %s708, 8
        %s710 = scalar_lea.vmem %s9, %s709
      $region68: #{tpu_custom_call.1} parent=63 // pred_fallthru
        _
    $region64: #{tpu_custom_call.1} parent=5 // pred_fallthru
      _
  $region6: #{tpu_custom_call.1} parent=0 // loop_footer
    %s19 = sadd.s32 1, %s15
  $region7: #{tpu_custom_call.1} parent=0 // loop_footer_branch
    %14 = sbr.rel target = $region3
  $region8: #{tpu_custom_call.1} parent=0 // loop_exit
    _

</llo_original>
